<compile_context>
chip_gen: v7x
topology: tpu7x:2x2x1
jax: 0.10.0
libtpu: 0.0.40
codegen_flags: <defaults>
</compile_context>

<pallas_src>
import functools

import numpy as np
import jax
import jax.numpy as jnp
from jax.experimental import pallas as pl
from jax.experimental.pallas import tpu as pltpu


_A = -0.75  # PyTorch bicubic convolution coefficient


def _cubic1(x):
    # |x| <= 1
    return ((_A + 2.0) * x - (_A + 3.0)) * x * x + 1.0


def _cubic2(x):
    # 1 < |x| < 2
    return ((_A * x - 5.0 * _A) * x + 8.0 * _A) * x - 4.0 * _A


def _bicubic_matrix(in_size, out_size):
    """(out_size, in_size) 1-D bicubic interpolation matrix matching
    torch F.interpolate(mode='bicubic', align_corners=False, antialias=False)."""
    scale = in_size / out_size
    m = np.zeros((out_size, in_size), dtype=np.float64)
    for i in range(out_size):
        coord = (i + 0.5) * scale - 0.5
        idx = int(np.floor(coord))
        t = coord - idx
        ws = (_cubic2(t + 1.0), _cubic1(t), _cubic1(1.0 - t), _cubic2(2.0 - t))
        for k in range(4):
            j = min(max(idx - 1 + k, 0), in_size - 1)  # border-replicate clamp
            m[i, j] += ws[k]
    return m


def _degradation_operator_t(size, scale_factor):
    """Transposed combined operator R^T = (U @ D)^T, shape (size, size), f32.
    R @ x applies bicubic downsample-then-upsample along one axis."""
    low = size // scale_factor
    d = _bicubic_matrix(size, low)    # (low, size)  downsample
    u = _bicubic_matrix(low, size)    # (size, low)  upsample
    r = u @ d                         # (size, size) combined, float64 host-side
    return jnp.asarray(r.T, dtype=jnp.float32)


def _bicubic_loss_kernel(rh_t_ref, rw_t_ref, sr_ref, hr_ref, out_ref, *, loss_type):
    """One grid step = TB images.  rec(X) = R_h @ X @ R_w^T applied to the
    (sr - hr) difference; the |.| / (.)^2 sum is this block's partial."""
    tb, h, w = sr_ref.shape

    diff = sr_ref[...].astype(jnp.float32) - hr_ref[...].astype(jnp.float32)

    # Stage 1 (columns): per-image  X @ R_w^T  as a single (TB*H, W) @ (W, W) matmul.
    y = jnp.dot(diff.reshape(tb * h, w), rw_t_ref[...],
                preferred_element_type=jnp.float32)            # (TB*H, W)

    # Stage 2 (rows): per-image R_h @ Y == (Y^T @ R_h^T)^T; the element-wise
    # reduction is transpose-invariant, so work directly on the transposed data.
    y_t = jnp.swapaxes(y.reshape(tb, h, w), 1, 2)              # (TB, W, H)
    z = jnp.dot(y_t.reshape(tb * w, h), rh_t_ref[...],
                preferred_element_type=jnp.float32)            # (TB*W, H)

    if loss_type == 'L1':
        partial = jnp.sum(jnp.abs(z))
    else:  # 'L2'
        partial = jnp.sum(z * z)

    out_ref[...] = jnp.zeros_like(out_ref) + partial


def _pick_batch_tile(n, h, w, itemsize, budget_bytes=2 << 20):
    """Largest divisor of n whose per-block image slab stays under budget
    (leaves ample headroom for double-buffered inputs + f32 intermediates,
    sized for v7x's smaller 64 MiB VMEM)."""
    per_img = max(1, h * w * max(int(itemsize), 4))
    max_tb = max(1, budget_bytes // per_img)
    tb = 1
    for d in range(1, n + 1):
        if n % d == 0 and d <= max_tb:
            tb = d
    return tb


def bicubic_degradation_loss(sr_image, hr_image, scale_factor=4, loss_type='L1'):
    if loss_type not in ('L1', 'L2'):
        raise ValueError("loss_type must be either 'L1' or 'L2'")

    B, C, H, W = hr_image.shape
    n = B * C

    # Constant combined operators (host-side, pre-transposed).
    rh_t = _degradation_operator_t(H, scale_factor)   # (H, H) = (U_h @ D_h)^T
    rw_t = _degradation_operator_t(W, scale_factor)   # (W, W) = (U_w @ D_w)^T

    # Keep native dtype in HBM; reshape is metadata-only.
    sr = sr_image.reshape(n, H, W)
    hr = hr_image.reshape(n, H, W)

    tb = _pick_batch_tile(n, H, W, jnp.dtype(hr.dtype).itemsize)
    num_blocks = n // tb

    kernel = functools.partial(_bicubic_loss_kernel, loss_type=loss_type)

    partials = pl.pallas_call(
        kernel,
        out_shape=jax.ShapeDtypeStruct((num_blocks, 1, 1), jnp.float32),
        grid_spec=pltpu.PrefetchScalarGridSpec(
            num_scalar_prefetch=0,
            grid=(num_blocks,),
            in_specs=[
                pl.BlockSpec((H, H), lambda i: (0, 0)),          # R_h^T (constant)
                pl.BlockSpec((W, W), lambda i: (0, 0)),          # R_w^T (constant)
                pl.BlockSpec((tb, H, W), lambda i: (i, 0, 0)),   # sr block
                pl.BlockSpec((tb, H, W), lambda i: (i, 0, 0)),   # hr block
            ],
            out_specs=pl.BlockSpec((1, 1, 1), lambda i: (i, 0, 0)),
        ),
        compiler_params=pltpu.CompilerParams(
            dimension_semantics=("parallel",),          # independent partials
            vmem_limit_bytes=32 * 1024 * 1024),
    )(rh_t, rw_t, sr, hr)

    # 'mean' reduction of nn.L1Loss / nn.MSELoss over all B*C*H*W elements.
    total = jnp.sum(partials)
    return total / (B * C * H * W)


if __name__ == "__main__":
    key = jax.random.PRNGKey(0)
    k1, k2 = jax.random.split(key)
    hr_image = jax.random.uniform(k1, (2, 4, 16, 16), dtype=jnp.float32)
    sr_image = hr_image + 0.1 * jax.random.normal(k2, (2, 4, 16, 16),
                                                  dtype=jnp.float32)

    loss = bicubic_degradation_loss(sr_image, hr_image,
                                    scale_factor=4, loss_type='L1')
    jax.block_until_ready(loss)
    print("KERNEL_OK")
</pallas_src>

<mosaic_0001>
module attributes {stable_mosaic.version = 11 : i64} {
  func.func @_bicubic_loss_kernel(%arg0: i32, %arg1: memref<16x16xf32, #tpu.memory_space<vmem>>, %arg2: memref<16x16xf32, #tpu.memory_space<vmem>>, %arg3: memref<8x16x16xf32, #tpu.memory_space<vmem>>, %arg4: memref<8x16x16xf32, #tpu.memory_space<vmem>>, %arg5: memref<1x1x1xf32, #tpu.memory_space<vmem>>) attributes {dimension_semantics = [#tpu.dimension_semantics<parallel>], iteration_bounds = array<i64: 1>, scalar_prefetch = 0 : i64, scratch_operands = 0 : i64, tpu.core_type = #tpu.core_type<tc>, window_params = [{pipeline_mode = #tpu.pipeline_mode<synchronous>, transform_indices = @transform_0, window_bounds = array<i64: 16, 16>}, {pipeline_mode = #tpu.pipeline_mode<synchronous>, transform_indices = @transform_1, window_bounds = array<i64: 16, 16>}, {transform_indices = @transform_2, window_bounds = array<i64: 8, 16, 16>}, {transform_indices = @transform_3, window_bounds = array<i64: 8, 16, 16>}, {transform_indices = @transform_4, window_bounds = array<i64: 1, 1, 1>}]} {
    %c0 = arith.constant 0 : index
    %c0_0 = arith.constant 0 : index
    %c0_1 = arith.constant 0 : index
    %0 = vector.load %arg3[%c0, %c0_0, %c0_1] : memref<8x16x16xf32, #tpu.memory_space<vmem>>, vector<8x16x16xf32>
    %c0_2 = arith.constant 0 : index
    %c0_3 = arith.constant 0 : index
    %c0_4 = arith.constant 0 : index
    %1 = vector.load %arg4[%c0_2, %c0_3, %c0_4] : memref<8x16x16xf32, #tpu.memory_space<vmem>>, vector<8x16x16xf32>
    %2 = arith.subf %0, %1 : vector<8x16x16xf32>
    %3 = vector.shape_cast %2 : vector<8x16x16xf32> to vector<128x16xf32>
    %c0_5 = arith.constant 0 : index
    %c0_6 = arith.constant 0 : index
    %4 = vector.load %arg2[%c0_5, %c0_6] : memref<16x16xf32, #tpu.memory_space<vmem>>, vector<16x16xf32>
    %cst = arith.constant dense<0.000000e+00> : vector<128x16xf32>
    %5 = tpu.matmul %3, %4, %cst {dimension_numbers = #tpu.dot_dimension_numbers<[1], [0], [0], [1], [0, 0, 1, 1], [], []>} : vector<128x16xf32>, vector<16x16xf32>, vector<128x16xf32> -> vector<128x16xf32>
    %6 = vector.shape_cast %5 : vector<128x16xf32> to vector<8x16x16xf32>
    %7 = tpu.transpose %6, [0, 2, 1] : vector<8x16x16xf32> -> vector<8x16x16xf32>
    %8 = vector.shape_cast %7 : vector<8x16x16xf32> to vector<128x16xf32>
    %c0_7 = arith.constant 0 : index
    %c0_8 = arith.constant 0 : index
    %9 = vector.load %arg1[%c0_7, %c0_8] : memref<16x16xf32, #tpu.memory_space<vmem>>, vector<16x16xf32>
    %cst_9 = arith.constant dense<0.000000e+00> : vector<128x16xf32>
    %10 = tpu.matmul %8, %9, %cst_9 {dimension_numbers = #tpu.dot_dimension_numbers<[1], [0], [0], [1], [0, 0, 1, 1], [], []>} : vector<128x16xf32>, vector<16x16xf32>, vector<128x16xf32> -> vector<128x16xf32>
    %11 = math.absf %10 : vector<128x16xf32>
    %12 = vector.shape_cast %11 : vector<128x16xf32> to vector<1x128x16xf32>
    %cst_10 = arith.constant dense<0.000000e+00> : vector<1xf32>
    %13 = vector.multi_reduction <add>, %12, %cst_10 [1, 2] : vector<1x128x16xf32> to vector<1xf32>
    %14 = vector.shape_cast %13 : vector<1xf32> to vector<1x1x1xf32>
    %15 = vector.extract %14[0, 0, 0] : f32 from vector<1x1x1xf32>
    %cst_11 = arith.constant 0.000000e+00 : f32
    %16 = vector.broadcast %cst_11 : f32 to vector<1x1x1xf32>
    %17 = vector.broadcast %15 : f32 to vector<1x1x1xf32>
    %18 = arith.addf %16, %17 : vector<1x1x1xf32>
    %c0_12 = arith.constant 0 : index
    %c0_13 = arith.constant 0 : index
    %c0_14 = arith.constant 0 : index
    %19 = vector.load %arg5[%c0_12, %c0_13, %c0_14] : memref<1x1x1xf32, #tpu.memory_space<vmem>>, vector<1x1x1xf32>
    tpu.vector_store %arg5[%c0_12, %c0_13, %c0_14], %18 {strides = array<i32>} : memref<1x1x1xf32, #tpu.memory_space<vmem>>, vector<1x1x1xf32>,
    return
  }
  func.func @transform_0(%arg0: i32) -> (i32, i32) {
    %c0_i32 = arith.constant 0 : i32
    %c0_i32_0 = arith.constant 0 : i32
    %c0_i32_1 = arith.constant 0 : i32
    return %c0_i32, %c0_i32_0 : i32, i32
  }
  func.func @transform_1(%arg0: i32) -> (i32, i32) {
    %c0_i32 = arith.constant 0 : i32
    %c0_i32_0 = arith.constant 0 : i32
    %c0_i32_1 = arith.constant 0 : i32
    return %c0_i32, %c0_i32_0 : i32, i32
  }
  func.func @transform_2(%arg0: i32) -> (i32, i32, i32) {
    %c0_i32 = arith.constant 0 : i32
    %c0_i32_0 = arith.constant 0 : i32
    %c0_i32_1 = arith.constant 0 : i32
    return %arg0, %c0_i32, %c0_i32_0 : i32, i32, i32
  }
  func.func @transform_3(%arg0: i32) -> (i32, i32, i32) {
    %c0_i32 = arith.constant 0 : i32
    %c0_i32_0 = arith.constant 0 : i32
    %c0_i32_1 = arith.constant 0 : i32
    return %arg0, %c0_i32, %c0_i32_0 : i32, i32, i32
  }
  func.func @transform_4(%arg0: i32) -> (i32, i32, i32) {
    %c0_i32 = arith.constant 0 : i32
    %c0_i32_0 = arith.constant 0 : i32
    %c0_i32_1 = arith.constant 0 : i32
    return %arg0, %c0_i32, %c0_i32_0 : i32, i32, i32
  }
}

</mosaic_0001>

<llo_original>
// kernel: tpu_custom_call.1
$region0: #{tpu_custom_call.1}
  #allocation0 [shape = 'u32[]', space=smem, size = 0x4, offset = 0x4, fixed_abs, tag = 'smem constant byte address 0x4 - core index']
  #allocation1 [shape = 'u32[144,128]{1,0:T(1,128)}', space=vmem, size = 0x12000, scoped, tag = 'internal scratch']
  %s0 = inlined_call_operand.hbm [shape: f32[16,16], index: 0, kind: input, shape index: {}]
  %s1 = inlined_call_operand.hbm [shape: f32[16,16], index: 1, kind: input, shape index: {}]
  %s2 = inlined_call_operand.hbm [shape: f32[8,16,16], index: 2, kind: input, shape index: {}]
  %s3 = inlined_call_operand.hbm [shape: f32[8,16,16], index: 3, kind: input, shape index: {}]
  %s4 = inlined_call_operand.hbm [shape: f32[1,1,1], index: 4, kind: output, shape index: {}]
  %s5 = sld [smem:[#allocation0]]
  $region42: #{tpu_custom_call.1} parent=0
    _
  %s7 = ssub.s32 1, %s5
  %s8 = scalar_select 0, %s7, %s5
  $region1: #{tpu_custom_call.1} parent=0
    #allocation2 [shape = 'u8[8192]{0}', space=vmem, size = 0x2000, scoped, tag = 'input window, operand 0, single buffered']
    #allocation3 [shape = 's32[1]{0}', space=sflag, size = 0x4, scoped, tag = 'scoped memory for tpu_custom_call.1']
    #allocation4 [shape = 's32[1]{0}', space=sflag, size = 0x4, scoped, tag = 'scoped memory for tpu_custom_call.1']
    #allocation5 [shape = 'u8[8192]{0}', space=vmem, size = 0x2000, scoped, tag = 'input window, operand 1, single buffered']
    #allocation6 [shape = 's32[1]{0}', space=sflag, size = 0x4, scoped, tag = 'scoped memory for tpu_custom_call.1']
    #allocation7 [shape = 'u8[65536]{0}', space=vmem, size = 0x10000, scoped, tag = 'input window, operand 2, single buffered']
    #allocation8 [shape = 'u8[65536]{0}', space=vmem, size = 0x10000, scoped, tag = 'input window, operand 3, single buffered']
    #allocation9 [shape = 's32[1]{0}', space=sflag, size = 0x4, scoped, tag = 'scoped memory for tpu_custom_call.1']
    #allocation10 [shape = 'u8[512]{0}', space=vmem, size = 0x400, scoped, tag = 'output window, operand 0, single buffered']
    %9 = vsyncpa [#allocation3], 0
    %10 = vsyncpa [#allocation6], 0
    %11 = vsyncpa [#allocation9], 0
    %12 = vsyncpa [#allocation4], 0
    // Predicated region
    $region2: #{tpu_custom_call.1} parent=1 // pred_check
      _
    $region3: #{tpu_custom_call.1} parent=1 // pred_check_branch
      %14 = sbr.rel (0) target = $region5
    $region4: #{tpu_custom_call.1} parent=1 // pred_region
      %s16 = ssub.s32 256, 256
      %17 = vsyncadd [#allocation3], %s16
      %s18 = sshll.u32 [#allocation2], 4
      %s19 = int_to_ptr.vmem [resolvable:$true] %s18
      %24 = dma.hbm_to_vmem [thread:$0]  %s0, 256, %s19, [#allocation3], 128, 128, 8
    $region5: #{tpu_custom_call.1} parent=1 // pred_fallthru
      _
    // Predicated region
    $region6: #{tpu_custom_call.1} parent=1 // pred_check
      _
    $region7: #{tpu_custom_call.1} parent=1 // pred_check_branch
      %26 = sbr.rel (0) target = $region9
    $region8: #{tpu_custom_call.1} parent=1 // pred_region
      %s28 = ssub.s32 256, 256
      %29 = vsyncadd [#allocation6], %s28
      %s30 = sshll.u32 [#allocation5], 4
      %s31 = int_to_ptr.vmem [resolvable:$true] %s30
      %36 = dma.hbm_to_vmem [thread:$0]  %s1, 256, %s31, [#allocation6], 128, 128, 8
    $region9: #{tpu_custom_call.1} parent=1 // pred_fallthru
      _
    // Predicated region
    $region10: #{tpu_custom_call.1} parent=1 // pred_check
      _
    $region11: #{tpu_custom_call.1} parent=1 // pred_check_branch
      %38 = sbr.rel (0) target = $region13
    $region12: #{tpu_custom_call.1} parent=1 // pred_region
      %s40 = ssub.s32 2048, 2048
      %41 = vsyncadd [#allocation6], %s40
      %s42 = sshll.u32 [#allocation7], 4
      %s43 = int_to_ptr.vmem [resolvable:$true] %s42
      %48 = dma.hbm_to_vmem [thread:$0]  %s2, 2048, %s43, [#allocation6], 128, 128, 8
    $region13: #{tpu_custom_call.1} parent=1 // pred_fallthru
      _
    // Predicated region
    $region14: #{tpu_custom_call.1} parent=1 // pred_check
      _
    $region15: #{tpu_custom_call.1} parent=1 // pred_check_branch
      %50 = sbr.rel (0) target = $region17
    $region16: #{tpu_custom_call.1} parent=1 // pred_region
      %s52 = ssub.s32 2048, 2048
      %53 = vsyncadd [#allocation9], %s52
      %s54 = sshll.u32 [#allocation8], 4
      %s55 = int_to_ptr.vmem [resolvable:$true] %s54
      %60 = dma.hbm_to_vmem [thread:$0]  %s3, 2048, %s55, [#allocation9], 128, 128, 8
    $region17: #{tpu_custom_call.1} parent=1 // pred_fallthru
      _
    // Predicated region
    $region18: #{tpu_custom_call.1} parent=1 // pred_check
      _
    $region19: #{tpu_custom_call.1} parent=1 // pred_check_branch
      %62 = sbr.rel (0) target = $region21
    $region20: #{tpu_custom_call.1} parent=1 // pred_region
      %63 = dma.done [#allocation3], 256
    $region21: #{tpu_custom_call.1} parent=1 // pred_fallthru
      _
    // Predicated region
    $region22: #{tpu_custom_call.1} parent=1 // pred_check
      _
    $region23: #{tpu_custom_call.1} parent=1 // pred_check_branch
      %65 = sbr.rel (0) target = $region25
    $region24: #{tpu_custom_call.1} parent=1 // pred_region
      %66 = dma.done [#allocation6], 256
    $region25: #{tpu_custom_call.1} parent=1 // pred_fallthru
      _
    // Predicated region
    $region26: #{tpu_custom_call.1} parent=1 // pred_check
      _
    $region27: #{tpu_custom_call.1} parent=1 // pred_check_branch
      %68 = sbr.rel (0) target = $region29
    $region28: #{tpu_custom_call.1} parent=1 // pred_region
      %69 = dma.done [#allocation6], 2048
    $region29: #{tpu_custom_call.1} parent=1 // pred_fallthru
      _
    // Predicated region
    $region30: #{tpu_custom_call.1} parent=1 // pred_check
      _
    $region31: #{tpu_custom_call.1} parent=1 // pred_check_branch
      %71 = sbr.rel (0) target = $region33
    $region32: #{tpu_custom_call.1} parent=1 // pred_region
      %72 = dma.done [#allocation9], 2048
    $region33: #{tpu_custom_call.1} parent=1 // pred_fallthru
      _
    %v73 = vld [vmem:[#allocation7] sm:$0xff]
    %v74 = vld [vmem:[#allocation7 + $0x8] sm:$0xff]
    %v75 = vld [vmem:[#allocation7 + $0x10] sm:$0xff]
    %v76 = vld [vmem:[#allocation7 + $0x18] sm:$0xff]
    %v77 = vld [vmem:[#allocation7 + $0x20] sm:$0xff]
    %v78 = vld [vmem:[#allocation7 + $0x28] sm:$0xff]
    %v79 = vld [vmem:[#allocation7 + $0x30] sm:$0xff]
    %v80 = vld [vmem:[#allocation7 + $0x38] sm:$0xff]
    %v81 = vld [vmem:[#allocation7 + $0x40] sm:$0xff]
    %v82 = vld [vmem:[#allocation7 + $0x48] sm:$0xff]
    %v83 = vld [vmem:[#allocation7 + $0x50] sm:$0xff]
    %v84 = vld [vmem:[#allocation7 + $0x58] sm:$0xff]
    %v85 = vld [vmem:[#allocation7 + $0x60] sm:$0xff]
    %v86 = vld [vmem:[#allocation7 + $0x68] sm:$0xff]
    %v87 = vld [vmem:[#allocation7 + $0x70] sm:$0xff]
    %v88 = vld [vmem:[#allocation7 + $0x78] sm:$0xff]
    %v89 = vld [vmem:[#allocation8] sm:$0xff]
    %v90 = vld [vmem:[#allocation8 + $0x8] sm:$0xff]
    %v91 = vld [vmem:[#allocation8 + $0x10] sm:$0xff]
    %v92 = vld [vmem:[#allocation8 + $0x18] sm:$0xff]
    %v93 = vld [vmem:[#allocation8 + $0x20] sm:$0xff]
    %v94 = vld [vmem:[#allocation8 + $0x28] sm:$0xff]
    %v95 = vld [vmem:[#allocation8 + $0x30] sm:$0xff]
    %v96 = vld [vmem:[#allocation8 + $0x38] sm:$0xff]
    %v97 = vld [vmem:[#allocation8 + $0x40] sm:$0xff]
    %v98 = vld [vmem:[#allocation8 + $0x48] sm:$0xff]
    %v99 = vld [vmem:[#allocation8 + $0x50] sm:$0xff]
    %v100 = vld [vmem:[#allocation8 + $0x58] sm:$0xff]
    %v101 = vld [vmem:[#allocation8 + $0x60] sm:$0xff]
    %v102 = vld [vmem:[#allocation8 + $0x68] sm:$0xff]
    %v103 = vld [vmem:[#allocation8 + $0x70] sm:$0xff]
    %v104 = vld [vmem:[#allocation8 + $0x78] sm:$0xff]
    %v105 = vsub.f32 %v73, %v89
    %v106 = vsub.f32 %v74, %v90
    %v107 = vsub.f32 %v75, %v91
    %v108 = vsub.f32 %v76, %v92
    %v109 = vsub.f32 %v77, %v93
    %v110 = vsub.f32 %v78, %v94
    %v111 = vsub.f32 %v79, %v95
    %v112 = vsub.f32 %v80, %v96
    %v113 = vsub.f32 %v81, %v97
    %v114 = vsub.f32 %v82, %v98
    %v115 = vsub.f32 %v83, %v99
    %v116 = vsub.f32 %v84, %v100
    %v117 = vsub.f32 %v85, %v101
    %v118 = vsub.f32 %v86, %v102
    %v119 = vsub.f32 %v87, %v103
    %v120 = vsub.f32 %v88, %v104
    %v121 = vld [vmem:[#allocation5] sm:$0xff]
    %v122 = vld [vmem:[#allocation5 + $0x8] sm:$0xff]
    %vm123 = vcmask 130048
    %v125 = vsel %vm123, %v105, 0
    %v128 = vsel %vm123, %v106, 0
    %v131 = vsel %vm123, %v107, 0
    %v134 = vsel %vm123, %v108, 0
    %v137 = vsel %vm123, %v109, 0
    %v140 = vsel %vm123, %v110, 0
    %v143 = vsel %vm123, %v111, 0
    %v146 = vsel %vm123, %v112, 0
    %v149 = vsel %vm123, %v113, 0
    %v152 = vsel %vm123, %v114, 0
    %v155 = vsel %vm123, %v115, 0
    %v158 = vsel %vm123, %v116, 0
    %v161 = vsel %vm123, %v117, 0
    %v164 = vsel %vm123, %v118, 0
    %v167 = vsel %vm123, %v119, 0
    %v170 = vsel %vm123, %v120, 0
    %172 = vmatprep.subr.mxu0 0.0
    %173 = vmatpush1.msra.mxu0 %v121
    %174 = vmatprep.subr.mxu0 0.0
    %175 = vmatpush1.msra.mxu0 %v122
    %176 = vmatprep.subr.mxu0 0.0
    %177 = vmatpush1.msra.mxu0 0.0
    %178 = vmatprep.subr.mxu0 0.0
    %179 = vmatpush1.msra.mxu0 0.0
    %180 = vmatprep.subr.mxu0 0.0
    %181 = vmatpush1.msra.mxu0 0.0
    %182 = vmatprep.subr.mxu0 0.0
    %183 = vmatpush1.msra.mxu0 0.0
    %184 = vmatprep.subr.mxu0 0.0
    %185 = vmatpush1.msra.mxu0 0.0
    %186 = vmatprep.subr.mxu0 0.0
    %187 = vmatpush1.msra.mxu0 0.0
    %188 = vmatprep.subr.mxu0 0.0
    %189 = vmatpush1.msra.mxu0 0.0
    %190 = vmatprep.subr.mxu0 0.0
    %191 = vmatpush1.msra.mxu0 0.0
    %192 = vmatprep.subr.mxu0 0.0
    %193 = vmatpush1.msra.mxu0 0.0
    %194 = vmatprep.subr.mxu0 0.0
    %195 = vmatpush1.msra.mxu0 0.0
    %196 = vmatprep.subr.mxu0 0.0
    %197 = vmatpush1.msra.mxu0 0.0
    %198 = vmatprep.subr.mxu0 0.0
    %199 = vmatpush1.msra.mxu0 0.0
    %200 = vmatprep.subr.mxu0 0.0
    %201 = vmatpush1.msra.mxu0 0.0
    %202 = vmatprep.subr.mxu0 0.0
    %203 = vmatpush1.msra.mxu0 0.0
    %204 = vmatprep.subr.mxu0 0.0
    %205 = vmatpush1.msra.mxu0 0.0
    %206 = vmatprep.subr.mxu0 0.0
    %207 = vmatpush1.msra.mxu0 0.0
    %208 = vmatprep.subr.mxu0 0.0
    %209 = vmatpush1.msra.mxu0 0.0
    %210 = vmatprep.subr.mxu0 0.0
    %211 = vmatpush1.msra.mxu0 0.0
    %212 = vmatprep.subr.mxu0 0.0
    %213 = vmatpush1.msra.mxu0 0.0
    %214 = vmatprep.subr.mxu0 0.0
    %215 = vmatpush1.msra.mxu0 0.0
    %216 = vmatprep.subr.mxu0 0.0
    %217 = vmatpush1.msra.mxu0 0.0
    %218 = vmatprep.subr.mxu0 0.0
    %219 = vmatpush1.msra.mxu0 0.0
    %220 = vmatprep.subr.mxu0 0.0
    %221 = vmatpush1.msra.mxu0 0.0
    %222 = vmatprep.subr.mxu0 0.0
    %223 = vmatpush1.msra.mxu0 0.0
    %224 = vmatprep.subr.mxu0 0.0
    %225 = vmatpush1.msra.mxu0 0.0
    %226 = vmatprep.subr.mxu0 0.0
    %227 = vmatpush1.msra.mxu0 0.0
    %228 = vmatprep.subr.mxu0 0.0
    %229 = vmatpush1.msra.mxu0 0.0
    %230 = vmatprep.subr.mxu0 0.0
    %231 = vmatpush1.msra.mxu0 0.0
    %232 = vmatprep.subr.mxu0 0.0
    %233 = vmatpush1.msra.mxu0 0.0
    %234 = vmatprep.subr.mxu0 0.0
    %235 = vmatpush1.msra.mxu0 0.0
    %236 = vmatprep.mubr.f32.mxu0 0.0
    %237 = vmatmul.mubr.f32.gmra.mrb[0].mxu0 %v125
    %v238 = vpop.f32.mrb[0].mxu0
    %v239 = vadd.f32 0.0, %v238
    %v240 = vpop.f32.mrb[0].mxu0
    %241 = vmatprep.mubr.f32.mxu0 0.0
    %242 = vmatmul.mubr.f32.gmra.mrb[0].mxu0 %v128
    %v243 = vpop.f32.mrb[0].mxu0
    %v244 = vadd.f32 0.0, %v243
    %v245 = vpop.f32.mrb[0].mxu0
    %246 = vmatprep.mubr.f32.mxu0 0.0
    %247 = vmatmul.mubr.f32.gmra.mrb[0].mxu0 %v131
    %v248 = vpop.f32.mrb[0].mxu0
    %v249 = vadd.f32 0.0, %v248
    %v250 = vpop.f32.mrb[0].mxu0
    %251 = vmatprep.mubr.f32.mxu0 0.0
    %252 = vmatmul.mubr.f32.gmra.mrb[0].mxu0 %v134
    %v253 = vpop.f32.mrb[0].mxu0
    %v254 = vadd.f32 0.0, %v253
    %v255 = vpop.f32.mrb[0].mxu0
    %256 = vmatprep.mubr.f32.mxu0 0.0
    %257 = vmatmul.mubr.f32.gmra.mrb[0].mxu0 %v137
    %v258 = vpop.f32.mrb[0].mxu0
    %v259 = vadd.f32 0.0, %v258
    %v260 = vpop.f32.mrb[0].mxu0
    %261 = vmatprep.mubr.f32.mxu0 0.0
    %262 = vmatmul.mubr.f32.gmra.mrb[0].mxu0 %v140
    %v263 = vpop.f32.mrb[0].mxu0
    %v264 = vadd.f32 0.0, %v263
    %v265 = vpop.f32.mrb[0].mxu0
    %266 = vmatprep.mubr.f32.mxu0 0.0
    %267 = vmatmul.mubr.f32.gmra.mrb[0].mxu0 %v143
    %v268 = vpop.f32.mrb[0].mxu0
    %v269 = vadd.f32 0.0, %v268
    %v270 = vpop.f32.mrb[0].mxu0
    %271 = vmatprep.mubr.f32.mxu0 0.0
    %272 = vmatmul.mubr.f32.gmra.mrb[0].mxu0 %v146
    %v273 = vpop.f32.mrb[0].mxu0
    %v274 = vadd.f32 0.0, %v273
    %v275 = vpop.f32.mrb[0].mxu0
    %276 = vmatprep.mubr.f32.mxu0 0.0
    %277 = vmatmul.mubr.f32.gmra.mrb[0].mxu0 %v149
    %v278 = vpop.f32.mrb[0].mxu0
    %v279 = vadd.f32 0.0, %v278
    %v280 = vpop.f32.mrb[0].mxu0
    %281 = vmatprep.mubr.f32.mxu0 0.0
    %282 = vmatmul.mubr.f32.gmra.mrb[0].mxu0 %v152
    %v283 = vpop.f32.mrb[0].mxu0
    %v284 = vadd.f32 0.0, %v283
    %v285 = vpop.f32.mrb[0].mxu0
    %286 = vmatprep.mubr.f32.mxu0 0.0
    %287 = vmatmul.mubr.f32.gmra.mrb[0].mxu0 %v155
    %v288 = vpop.f32.mrb[0].mxu0
    %v289 = vadd.f32 0.0, %v288
    %v290 = vpop.f32.mrb[0].mxu0
    %291 = vmatprep.mubr.f32.mxu0 0.0
    %292 = vmatmul.mubr.f32.gmra.mrb[0].mxu0 %v158
    %v293 = vpop.f32.mrb[0].mxu0
    %v294 = vadd.f32 0.0, %v293
    %v295 = vpop.f32.mrb[0].mxu0
    %296 = vmatprep.mubr.f32.mxu0 0.0
    %297 = vmatmul.mubr.f32.gmra.mrb[0].mxu0 %v161
    %v298 = vpop.f32.mrb[0].mxu0
    %v299 = vadd.f32 0.0, %v298
    %v300 = vpop.f32.mrb[0].mxu0
    %301 = vmatprep.mubr.f32.mxu0 0.0
    %302 = vmatmul.mubr.f32.gmra.mrb[0].mxu0 %v164
    %v303 = vpop.f32.mrb[0].mxu0
    %v304 = vadd.f32 0.0, %v303
    %v305 = vpop.f32.mrb[0].mxu0
    %306 = vmatprep.mubr.f32.mxu0 0.0
    %307 = vmatmul.mubr.f32.gmra.mrb[0].mxu0 %v167
    %v308 = vpop.f32.mrb[0].mxu0
    %v309 = vadd.f32 0.0, %v308
    %v310 = vpop.f32.mrb[0].mxu0
    %311 = vmatprep.mubr.f32.mxu0 0.0
    %312 = vmatmul.mubr.f32.gmra.mrb[0].mxu0 %v170
    %v313 = vpop.f32.mrb[0].mxu0
    %v314 = vadd.f32 0.0, %v313
    %v315 = vpop.f32.mrb[0].mxu0
    %316 = vdwg.mxu0
    %317 = vxpose.xlu0.b32.start [1/16] %v239, 128
    %318 = vxpose.xlu0.b32.cont [2/16] %v244, 128
    %319 = vxpose.xlu0.b32.cont [3/16] 0.0, 128
    %320 = vxpose.xlu0.b32.cont [4/16] 0.0, 128
    %321 = vxpose.xlu0.b32.cont [5/16] 0.0, 128
    %322 = vxpose.xlu0.b32.cont [6/16] 0.0, 128
    %323 = vxpose.xlu0.b32.cont [7/16] 0.0, 128
    %324 = vxpose.xlu0.b32.cont [8/16] 0.0, 128
    %325 = vxpose.xlu0.b32.cont [9/16] 0.0, 128
    %326 = vxpose.xlu0.b32.cont [10/16] 0.0, 128
    %327 = vxpose.xlu0.b32.cont [11/16] 0.0, 128
    %328 = vxpose.xlu0.b32.cont [12/16] 0.0, 128
    %329 = vxpose.xlu0.b32.cont [13/16] 0.0, 128
    %330 = vxpose.xlu0.b32.cont [14/16] 0.0, 128
    %331 = vxpose.xlu0.b32.cont [15/16] 0.0, 128
    %332 = vxpose.xlu0.b32.end [16/16] 0.0, 128
    %v333 = vpop.trf.xlu0
    %v334 = vpop.trf.xlu0
    %v335 = vpop.trf.xlu0
    %v336 = vpop.trf.xlu0
    %v337 = vpop.trf.xlu0
    %v338 = vpop.trf.xlu0
    %v339 = vpop.trf.xlu0
    %v340 = vpop.trf.xlu0
    %v341 = vpop.trf.xlu0
    %v342 = vpop.trf.xlu0
    %v343 = vpop.trf.xlu0
    %v344 = vpop.trf.xlu0
    %v345 = vpop.trf.xlu0
    %v346 = vpop.trf.xlu0
    %v347 = vpop.trf.xlu0
    %v348 = vpop.trf.xlu0
    %349 = vxpose.xlu0.b32.start [1/16] %v249, 128
    %350 = vxpose.xlu0.b32.cont [2/16] %v254, 128
    %351 = vxpose.xlu0.b32.cont [3/16] 0.0, 128
    %352 = vxpose.xlu0.b32.cont [4/16] 0.0, 128
    %353 = vxpose.xlu0.b32.cont [5/16] 0.0, 128
    %354 = vxpose.xlu0.b32.cont [6/16] 0.0, 128
    %355 = vxpose.xlu0.b32.cont [7/16] 0.0, 128
    %356 = vxpose.xlu0.b32.cont [8/16] 0.0, 128
    %357 = vxpose.xlu0.b32.cont [9/16] 0.0, 128
    %358 = vxpose.xlu0.b32.cont [10/16] 0.0, 128
    %359 = vxpose.xlu0.b32.cont [11/16] 0.0, 128
    %360 = vxpose.xlu0.b32.cont [12/16] 0.0, 128
    %361 = vxpose.xlu0.b32.cont [13/16] 0.0, 128
    %362 = vxpose.xlu0.b32.cont [14/16] 0.0, 128
    %363 = vxpose.xlu0.b32.cont [15/16] 0.0, 128
    %364 = vxpose.xlu0.b32.end [16/16] 0.0, 128
    %v365 = vpop.trf.xlu0
    %v366 = vpop.trf.xlu0
    %v367 = vpop.trf.xlu0
    %v368 = vpop.trf.xlu0
    %v369 = vpop.trf.xlu0
    %v370 = vpop.trf.xlu0
    %v371 = vpop.trf.xlu0
    %v372 = vpop.trf.xlu0
    %v373 = vpop.trf.xlu0
    %v374 = vpop.trf.xlu0
    %v375 = vpop.trf.xlu0
    %v376 = vpop.trf.xlu0
    %v377 = vpop.trf.xlu0
    %v378 = vpop.trf.xlu0
    %v379 = vpop.trf.xlu0
    %v380 = vpop.trf.xlu0
    %381 = vxpose.xlu0.b32.start [1/16] %v259, 128
    %382 = vxpose.xlu0.b32.cont [2/16] %v264, 128
    %383 = vxpose.xlu0.b32.cont [3/16] 0.0, 128
    %384 = vxpose.xlu0.b32.cont [4/16] 0.0, 128
    %385 = vxpose.xlu0.b32.cont [5/16] 0.0, 128
    %386 = vxpose.xlu0.b32.cont [6/16] 0.0, 128
    %387 = vxpose.xlu0.b32.cont [7/16] 0.0, 128
    %388 = vxpose.xlu0.b32.cont [8/16] 0.0, 128
    %389 = vxpose.xlu0.b32.cont [9/16] 0.0, 128
    %390 = vxpose.xlu0.b32.cont [10/16] 0.0, 128
    %391 = vxpose.xlu0.b32.cont [11/16] 0.0, 128
    %392 = vxpose.xlu0.b32.cont [12/16] 0.0, 128
    %393 = vxpose.xlu0.b32.cont [13/16] 0.0, 128
    %394 = vxpose.xlu0.b32.cont [14/16] 0.0, 128
    %395 = vxpose.xlu0.b32.cont [15/16] 0.0, 128
    %396 = vxpose.xlu0.b32.end [16/16] 0.0, 128
    %v397 = vpop.trf.xlu0
    %v398 = vpop.trf.xlu0
    %v399 = vpop.trf.xlu0
    %v400 = vpop.trf.xlu0
    %v401 = vpop.trf.xlu0
    %v402 = vpop.trf.xlu0
    %v403 = vpop.trf.xlu0
    %v404 = vpop.trf.xlu0
    %v405 = vpop.trf.xlu0
    %v406 = vpop.trf.xlu0
    %v407 = vpop.trf.xlu0
    %v408 = vpop.trf.xlu0
    %v409 = vpop.trf.xlu0
    %v410 = vpop.trf.xlu0
    %v411 = vpop.trf.xlu0
    %v412 = vpop.trf.xlu0
    %413 = vxpose.xlu0.b32.start [1/16] %v269, 128
    %414 = vxpose.xlu0.b32.cont [2/16] %v274, 128
    %415 = vxpose.xlu0.b32.cont [3/16] 0.0, 128
    %416 = vxpose.xlu0.b32.cont [4/16] 0.0, 128
    %417 = vxpose.xlu0.b32.cont [5/16] 0.0, 128
    %418 = vxpose.xlu0.b32.cont [6/16] 0.0, 128
    %419 = vxpose.xlu0.b32.cont [7/16] 0.0, 128
    %420 = vxpose.xlu0.b32.cont [8/16] 0.0, 128
    %421 = vxpose.xlu0.b32.cont [9/16] 0.0, 128
    %422 = vxpose.xlu0.b32.cont [10/16] 0.0, 128
    %423 = vxpose.xlu0.b32.cont [11/16] 0.0, 128
    %424 = vxpose.xlu0.b32.cont [12/16] 0.0, 128
    %425 = vxpose.xlu0.b32.cont [13/16] 0.0, 128
    %426 = vxpose.xlu0.b32.cont [14/16] 0.0, 128
    %427 = vxpose.xlu0.b32.cont [15/16] 0.0, 128
    %428 = vxpose.xlu0.b32.end [16/16] 0.0, 128
    %v429 = vpop.trf.xlu0
    %v430 = vpop.trf.xlu0
    %v431 = vpop.trf.xlu0
    %v432 = vpop.trf.xlu0
    %v433 = vpop.trf.xlu0
    %v434 = vpop.trf.xlu0
    %v435 = vpop.trf.xlu0
    %v436 = vpop.trf.xlu0
    %v437 = vpop.trf.xlu0
    %v438 = vpop.trf.xlu0
    %v439 = vpop.trf.xlu0
    %v440 = vpop.trf.xlu0
    %v441 = vpop.trf.xlu0
    %v442 = vpop.trf.xlu0
    %v443 = vpop.trf.xlu0
    %v444 = vpop.trf.xlu0
    %445 = vxpose.xlu0.b32.start [1/16] %v279, 128
    %446 = vxpose.xlu0.b32.cont [2/16] %v284, 128
    %447 = vxpose.xlu0.b32.cont [3/16] 0.0, 128
    %448 = vxpose.xlu0.b32.cont [4/16] 0.0, 128
    %449 = vxpose.xlu0.b32.cont [5/16] 0.0, 128
    %450 = vxpose.xlu0.b32.cont [6/16] 0.0, 128
    %451 = vxpose.xlu0.b32.cont [7/16] 0.0, 128
    %452 = vxpose.xlu0.b32.cont [8/16] 0.0, 128
    %453 = vxpose.xlu0.b32.cont [9/16] 0.0, 128
    %454 = vxpose.xlu0.b32.cont [10/16] 0.0, 128
    %455 = vxpose.xlu0.b32.cont [11/16] 0.0, 128
    %456 = vxpose.xlu0.b32.cont [12/16] 0.0, 128
    %457 = vxpose.xlu0.b32.cont [13/16] 0.0, 128
    %458 = vxpose.xlu0.b32.cont [14/16] 0.0, 128
    %459 = vxpose.xlu0.b32.cont [15/16] 0.0, 128
    %460 = vxpose.xlu0.b32.end [16/16] 0.0, 128
    %v461 = vpop.trf.xlu0
    %v462 = vpop.trf.xlu0
    %v463 = vpop.trf.xlu0
    %v464 = vpop.trf.xlu0
    %v465 = vpop.trf.xlu0
    %v466 = vpop.trf.xlu0
    %v467 = vpop.trf.xlu0
    %v468 = vpop.trf.xlu0
    %v469 = vpop.trf.xlu0
    %v470 = vpop.trf.xlu0
    %v471 = vpop.trf.xlu0
    %v472 = vpop.trf.xlu0
    %v473 = vpop.trf.xlu0
    %v474 = vpop.trf.xlu0
    %v475 = vpop.trf.xlu0
    %v476 = vpop.trf.xlu0
    %477 = vxpose.xlu0.b32.start [1/16] %v289, 128
    %478 = vxpose.xlu0.b32.cont [2/16] %v294, 128
    %479 = vxpose.xlu0.b32.cont [3/16] 0.0, 128
    %480 = vxpose.xlu0.b32.cont [4/16] 0.0, 128
    %481 = vxpose.xlu0.b32.cont [5/16] 0.0, 128
    %482 = vxpose.xlu0.b32.cont [6/16] 0.0, 128
    %483 = vxpose.xlu0.b32.cont [7/16] 0.0, 128
    %484 = vxpose.xlu0.b32.cont [8/16] 0.0, 128
    %485 = vxpose.xlu0.b32.cont [9/16] 0.0, 128
    %486 = vxpose.xlu0.b32.cont [10/16] 0.0, 128
    %487 = vxpose.xlu0.b32.cont [11/16] 0.0, 128
    %488 = vxpose.xlu0.b32.cont [12/16] 0.0, 128
    %489 = vxpose.xlu0.b32.cont [13/16] 0.0, 128
    %490 = vxpose.xlu0.b32.cont [14/16] 0.0, 128
    %491 = vxpose.xlu0.b32.cont [15/16] 0.0, 128
    %492 = vxpose.xlu0.b32.end [16/16] 0.0, 128
    %v493 = vpop.trf.xlu0
    %v494 = vpop.trf.xlu0
    %v495 = vpop.trf.xlu0
    %v496 = vpop.trf.xlu0
    %v497 = vpop.trf.xlu0
    %v498 = vpop.trf.xlu0
    %v499 = vpop.trf.xlu0
    %v500 = vpop.trf.xlu0
    %v501 = vpop.trf.xlu0
    %v502 = vpop.trf.xlu0
    %v503 = vpop.trf.xlu0
    %v504 = vpop.trf.xlu0
    %v505 = vpop.trf.xlu0
    %v506 = vpop.trf.xlu0
    %v507 = vpop.trf.xlu0
    %v508 = vpop.trf.xlu0
    %509 = vxpose.xlu0.b32.start [1/16] %v299, 128
    %510 = vxpose.xlu0.b32.cont [2/16] %v304, 128
    %511 = vxpose.xlu0.b32.cont [3/16] 0.0, 128
    %512 = vxpose.xlu0.b32.cont [4/16] 0.0, 128
    %513 = vxpose.xlu0.b32.cont [5/16] 0.0, 128
    %514 = vxpose.xlu0.b32.cont [6/16] 0.0, 128
    %515 = vxpose.xlu0.b32.cont [7/16] 0.0, 128
    %516 = vxpose.xlu0.b32.cont [8/16] 0.0, 128
    %517 = vxpose.xlu0.b32.cont [9/16] 0.0, 128
    %518 = vxpose.xlu0.b32.cont [10/16] 0.0, 128
    %519 = vxpose.xlu0.b32.cont [11/16] 0.0, 128
    %520 = vxpose.xlu0.b32.cont [12/16] 0.0, 128
    %521 = vxpose.xlu0.b32.cont [13/16] 0.0, 128
    %522 = vxpose.xlu0.b32.cont [14/16] 0.0, 128
    %523 = vxpose.xlu0.b32.cont [15/16] 0.0, 128
    %524 = vxpose.xlu0.b32.end [16/16] 0.0, 128
    %v525 = vpop.trf.xlu0
    %v526 = vpop.trf.xlu0
    %v527 = vpop.trf.xlu0
    %v528 = vpop.trf.xlu0
    %v529 = vpop.trf.xlu0
    %v530 = vpop.trf.xlu0
    %v531 = vpop.trf.xlu0
    %v532 = vpop.trf.xlu0
    %v533 = vpop.trf.xlu0
    %v534 = vpop.trf.xlu0
    %v535 = vpop.trf.xlu0
    %v536 = vpop.trf.xlu0
    %v537 = vpop.trf.xlu0
    %v538 = vpop.trf.xlu0
    %v539 = vpop.trf.xlu0
    %v540 = vpop.trf.xlu0
    %541 = vxpose.xlu0.b32.start [1/16] %v309, 128
    %542 = vxpose.xlu0.b32.cont [2/16] %v314, 128
    %543 = vxpose.xlu0.b32.cont [3/16] 0.0, 128
    %544 = vxpose.xlu0.b32.cont [4/16] 0.0, 128
    %545 = vxpose.xlu0.b32.cont [5/16] 0.0, 128
    %546 = vxpose.xlu0.b32.cont [6/16] 0.0, 128
    %547 = vxpose.xlu0.b32.cont [7/16] 0.0, 128
    %548 = vxpose.xlu0.b32.cont [8/16] 0.0, 128
    %549 = vxpose.xlu0.b32.cont [9/16] 0.0, 128
    %550 = vxpose.xlu0.b32.cont [10/16] 0.0, 128
    %551 = vxpose.xlu0.b32.cont [11/16] 0.0, 128
    %552 = vxpose.xlu0.b32.cont [12/16] 0.0, 128
    %553 = vxpose.xlu0.b32.cont [13/16] 0.0, 128
    %554 = vxpose.xlu0.b32.cont [14/16] 0.0, 128
    %555 = vxpose.xlu0.b32.cont [15/16] 0.0, 128
    %556 = vxpose.xlu0.b32.end [16/16] 0.0, 128
    %v557 = vpop.trf.xlu0
    %v558 = vpop.trf.xlu0
    %v559 = vpop.trf.xlu0
    %v560 = vpop.trf.xlu0
    %v561 = vpop.trf.xlu0
    %v562 = vpop.trf.xlu0
    %v563 = vpop.trf.xlu0
    %v564 = vpop.trf.xlu0
    %v565 = vpop.trf.xlu0
    %v566 = vpop.trf.xlu0
    %v567 = vpop.trf.xlu0
    %v568 = vpop.trf.xlu0
    %v569 = vpop.trf.xlu0
    %v570 = vpop.trf.xlu0
    %v571 = vpop.trf.xlu0
    %v572 = vpop.trf.xlu0
    %v573 = vld [vmem:[#allocation2] sm:$0xff]
    %v574 = vld [vmem:[#allocation2 + $0x8] sm:$0xff]
    %v576 = vsel %vm123, %v333, 0
    %v579 = vsel %vm123, %v334, 0
    %v582 = vsel %vm123, %v365, 0
    %v585 = vsel %vm123, %v366, 0
    %v588 = vsel %vm123, %v397, 0
    %v591 = vsel %vm123, %v398, 0
    %v594 = vsel %vm123, %v429, 0
    %v597 = vsel %vm123, %v430, 0
    %v600 = vsel %vm123, %v461, 0
    %v603 = vsel %vm123, %v462, 0
    %v606 = vsel %vm123, %v493, 0
    %v609 = vsel %vm123, %v494, 0
    %v612 = vsel %vm123, %v525, 0
    %v615 = vsel %vm123, %v526, 0
    %v618 = vsel %vm123, %v557, 0
    %v621 = vsel %vm123, %v558, 0
    %623 = vmatprep.subr.mxu0 0.0
    %624 = vmatpush1.msra.mxu0 %v573
    %625 = vmatprep.subr.mxu0 0.0
    %626 = vmatpush1.msra.mxu0 %v574
    %627 = vmatprep.subr.mxu0 0.0
    %628 = vmatpush1.msra.mxu0 0.0
    %629 = vmatprep.subr.mxu0 0.0
    %630 = vmatpush1.msra.mxu0 0.0
    %631 = vmatprep.subr.mxu0 0.0
    %632 = vmatpush1.msra.mxu0 0.0
    %633 = vmatprep.subr.mxu0 0.0
    %634 = vmatpush1.msra.mxu0 0.0
    %635 = vmatprep.subr.mxu0 0.0
    %636 = vmatpush1.msra.mxu0 0.0
    %637 = vmatprep.subr.mxu0 0.0
    %638 = vmatpush1.msra.mxu0 0.0
    %639 = vmatprep.subr.mxu0 0.0
    %640 = vmatpush1.msra.mxu0 0.0
    %641 = vmatprep.subr.mxu0 0.0
    %642 = vmatpush1.msra.mxu0 0.0
    %643 = vmatprep.subr.mxu0 0.0
    %644 = vmatpush1.msra.mxu0 0.0
    %645 = vmatprep.subr.mxu0 0.0
    %646 = vmatpush1.msra.mxu0 0.0
    %647 = vmatprep.subr.mxu0 0.0
    %648 = vmatpush1.msra.mxu0 0.0
    %649 = vmatprep.subr.mxu0 0.0
    %650 = vmatpush1.msra.mxu0 0.0
    %651 = vmatprep.subr.mxu0 0.0
    %652 = vmatpush1.msra.mxu0 0.0
    %653 = vmatprep.subr.mxu0 0.0
    %654 = vmatpush1.msra.mxu0 0.0
    %655 = vmatprep.subr.mxu0 0.0
    %656 = vmatpush1.msra.mxu0 0.0
    %657 = vmatprep.subr.mxu0 0.0
    %658 = vmatpush1.msra.mxu0 0.0
    %659 = vmatprep.subr.mxu0 0.0
    %660 = vmatpush1.msra.mxu0 0.0
    %661 = vmatprep.subr.mxu0 0.0
    %662 = vmatpush1.msra.mxu0 0.0
    %663 = vmatprep.subr.mxu0 0.0
    %664 = vmatpush1.msra.mxu0 0.0
    %665 = vmatprep.subr.mxu0 0.0
    %666 = vmatpush1.msra.mxu0 0.0
    %667 = vmatprep.subr.mxu0 0.0
    %668 = vmatpush1.msra.mxu0 0.0
    %669 = vmatprep.subr.mxu0 0.0
    %670 = vmatpush1.msra.mxu0 0.0
    %671 = vmatprep.subr.mxu0 0.0
    %672 = vmatpush1.msra.mxu0 0.0
    %673 = vmatprep.subr.mxu0 0.0
    %674 = vmatpush1.msra.mxu0 0.0
    %675 = vmatprep.subr.mxu0 0.0
    %676 = vmatpush1.msra.mxu0 0.0
    %677 = vmatprep.subr.mxu0 0.0
    %678 = vmatpush1.msra.mxu0 0.0
    %679 = vmatprep.subr.mxu0 0.0
    %680 = vmatpush1.msra.mxu0 0.0
    %681 = vmatprep.subr.mxu0 0.0
    %682 = vmatpush1.msra.mxu0 0.0
    %683 = vmatprep.subr.mxu0 0.0
    %684 = vmatpush1.msra.mxu0 0.0
    %685 = vmatprep.subr.mxu0 0.0
    %686 = vmatpush1.msra.mxu0 0.0
    %687 = vmatprep.mubr.f32.mxu0 0.0
    %688 = vmatmul.mubr.f32.gmra.mrb[0].mxu0 %v576
    %v689 = vpop.f32.mrb[0].mxu0
    %v690 = vadd.f32 0.0, %v689
    %v691 = vpop.f32.mrb[0].mxu0
    %692 = vmatprep.mubr.f32.mxu0 0.0
    %693 = vmatmul.mubr.f32.gmra.mrb[0].mxu0 %v579
    %v694 = vpop.f32.mrb[0].mxu0
    %v695 = vadd.f32 0.0, %v694
    %v696 = vpop.f32.mrb[0].mxu0
    %697 = vmatprep.mubr.f32.mxu0 0.0
    %698 = vmatmul.mubr.f32.gmra.mrb[0].mxu0 %v582
    %v699 = vpop.f32.mrb[0].mxu0
    %v700 = vadd.f32 0.0, %v699
    %v701 = vpop.f32.mrb[0].mxu0
    %702 = vmatprep.mubr.f32.mxu0 0.0
    %703 = vmatmul.mubr.f32.gmra.mrb[0].mxu0 %v585
    %v704 = vpop.f32.mrb[0].mxu0
    %v705 = vadd.f32 0.0, %v704
    %v706 = vpop.f32.mrb[0].mxu0
    %707 = vmatprep.mubr.f32.mxu0 0.0
    %708 = vmatmul.mubr.f32.gmra.mrb[0].mxu0 %v588
    %v709 = vpop.f32.mrb[0].mxu0
    %v710 = vadd.f32 0.0, %v709
    %v711 = vpop.f32.mrb[0].mxu0
    %712 = vmatprep.mubr.f32.mxu0 0.0
    %713 = vmatmul.mubr.f32.gmra.mrb[0].mxu0 %v591
    %v714 = vpop.f32.mrb[0].mxu0
    %v715 = vadd.f32 0.0, %v714
    %v716 = vpop.f32.mrb[0].mxu0
    %717 = vmatprep.mubr.f32.mxu0 0.0
    %718 = vmatmul.mubr.f32.gmra.mrb[0].mxu0 %v594
    %v719 = vpop.f32.mrb[0].mxu0
    %v720 = vadd.f32 0.0, %v719
    %v721 = vpop.f32.mrb[0].mxu0
    %722 = vmatprep.mubr.f32.mxu0 0.0
    %723 = vmatmul.mubr.f32.gmra.mrb[0].mxu0 %v597
    %v724 = vpop.f32.mrb[0].mxu0
    %v725 = vadd.f32 0.0, %v724
    %v726 = vpop.f32.mrb[0].mxu0
    %727 = vmatprep.mubr.f32.mxu0 0.0
    %728 = vmatmul.mubr.f32.gmra.mrb[0].mxu0 %v600
    %v729 = vpop.f32.mrb[0].mxu0
    %v730 = vadd.f32 0.0, %v729
    %v731 = vpop.f32.mrb[0].mxu0
    %732 = vmatprep.mubr.f32.mxu0 0.0
    %733 = vmatmul.mubr.f32.gmra.mrb[0].mxu0 %v603
    %v734 = vpop.f32.mrb[0].mxu0
    %v735 = vadd.f32 0.0, %v734
    %v736 = vpop.f32.mrb[0].mxu0
    %737 = vmatprep.mubr.f32.mxu0 0.0
    %738 = vmatmul.mubr.f32.gmra.mrb[0].mxu0 %v606
    %v739 = vpop.f32.mrb[0].mxu0
    %v740 = vadd.f32 0.0, %v739
    %v741 = vpop.f32.mrb[0].mxu0
    %742 = vmatprep.mubr.f32.mxu0 0.0
    %743 = vmatmul.mubr.f32.gmra.mrb[0].mxu0 %v609
    %v744 = vpop.f32.mrb[0].mxu0
    %v745 = vadd.f32 0.0, %v744
    %v746 = vpop.f32.mrb[0].mxu0
    %747 = vmatprep.mubr.f32.mxu0 0.0
    %748 = vmatmul.mubr.f32.gmra.mrb[0].mxu0 %v612
    %v749 = vpop.f32.mrb[0].mxu0
    %v750 = vadd.f32 0.0, %v749
    %v751 = vpop.f32.mrb[0].mxu0
    %752 = vmatprep.mubr.f32.mxu0 0.0
    %753 = vmatmul.mubr.f32.gmra.mrb[0].mxu0 %v615
    %v754 = vpop.f32.mrb[0].mxu0
    %v755 = vadd.f32 0.0, %v754
    %v756 = vpop.f32.mrb[0].mxu0
    %757 = vmatprep.mubr.f32.mxu0 0.0
    %758 = vmatmul.mubr.f32.gmra.mrb[0].mxu0 %v618
    %v759 = vpop.f32.mrb[0].mxu0
    %v760 = vadd.f32 0.0, %v759
    %v761 = vpop.f32.mrb[0].mxu0
    %762 = vmatprep.mubr.f32.mxu0 0.0
    %763 = vmatmul.mubr.f32.gmra.mrb[0].mxu0 %v621
    %v764 = vpop.f32.mrb[0].mxu0
    %v765 = vadd.f32 0.0, %v764
    %v766 = vpop.f32.mrb[0].mxu0
    %767 = vdwg.mxu0
    %v768 = vand.u32 2147483647, %v690
    %v769 = vand.u32 2147483647, %v695
    %v770 = vand.u32 2147483647, %v700
    %v771 = vand.u32 2147483647, %v705
    %v772 = vand.u32 2147483647, %v710
    %v773 = vand.u32 2147483647, %v715
    %v774 = vand.u32 2147483647, %v720
    %v775 = vand.u32 2147483647, %v725
    %v776 = vand.u32 2147483647, %v730
    %v777 = vand.u32 2147483647, %v735
    %v778 = vand.u32 2147483647, %v740
    %v779 = vand.u32 2147483647, %v745
    %v780 = vand.u32 2147483647, %v750
    %v781 = vand.u32 2147483647, %v755
    %v782 = vand.u32 2147483647, %v760
    %v783 = vand.u32 2147483647, %v765
    %v784 = vsel %vm123, %v768, 0.0
    %v785 = vsel %vm123, %v769, 0.0
    %v786 = vadd.f32 %v784, %v785
    %v787 = vsel %vm123, %v770, 0.0
    %v788 = vadd.f32 %v786, %v787
    %v789 = vsel %vm123, %v771, 0.0
    %v790 = vadd.f32 %v788, %v789
    %v791 = vsel %vm123, %v772, 0.0
    %v792 = vadd.f32 %v790, %v791
    %v793 = vsel %vm123, %v773, 0.0
    %v794 = vadd.f32 %v792, %v793
    %v795 = vsel %vm123, %v774, 0.0
    %v796 = vadd.f32 %v794, %v795
    %v797 = vsel %vm123, %v775, 0.0
    %v798 = vadd.f32 %v796, %v797
    %v799 = vsel %vm123, %v776, 0.0
    %v800 = vadd.f32 %v798, %v799
    %v801 = vsel %vm123, %v777, 0.0
    %v802 = vadd.f32 %v800, %v801
    %v803 = vsel %vm123, %v778, 0.0
    %v804 = vadd.f32 %v802, %v803
    %v805 = vsel %vm123, %v779, 0.0
    %v806 = vadd.f32 %v804, %v805
    %v807 = vsel %vm123, %v780, 0.0
    %v808 = vadd.f32 %v806, %v807
    %v809 = vsel %vm123, %v781, 0.0
    %v810 = vadd.f32 %v808, %v809
    %v811 = vsel %vm123, %v782, 0.0
    %v812 = vadd.f32 %v810, %v811
    %v813 = vsel %vm123, %v783, 0.0
    %v814 = vadd.f32 %v812, %v813
    %815 = vadd.xlane.f32.xlu0 %v814
    %v816 = vpop.xlane.xlu0 %815
    %v817 = vrot.slane %v816, 4
    %v818 = vadd.f32 %v816, %v817
    %v819 = vrot.slane %v818, 2
    %v820 = vadd.f32 %v818, %v819
    %v821 = vrot.slane %v820, 1
    %v822 = vadd.f32 %v820, %v821
    %s823 = vtos %v822
    %v824 = vstv %s823
    %v825 = vadd.f32 %v824, 0.0
    %vm826 = vcmask 0
    %827 = vst.msk [vmem:[#allocation10] sm:$0x1] %vm826, %v825
    // Predicated region
    $region34: #{tpu_custom_call.1} parent=1 // pred_check
      _
    $region35: #{tpu_custom_call.1} parent=1 // pred_check_branch
      %829 = sbr.rel (0) target = $region37
    $region36: #{tpu_custom_call.1} parent=1 // pred_region
      %s831 = ssub.s32 16, 16
      %832 = vsyncadd [#allocation4], %s831
      %s834 = sshll.u32 [#allocation10], 4
      %s835 = int_to_ptr.vmem [resolvable:$true] %s834
      %837 = dma.vmem_to_hbm [thread:$0]  %s835, 16, %s4, [#allocation4]
    $region37: #{tpu_custom_call.1} parent=1 // pred_fallthru
      _
    // Predicated region
    $region38: #{tpu_custom_call.1} parent=1 // pred_check
      _
    $region39: #{tpu_custom_call.1} parent=1 // pred_check_branch
      %839 = sbr.rel (0) target = $region41
    $region40: #{tpu_custom_call.1} parent=1 // pred_region
      %840 = dma.done [#allocation4], 16
    $region41: #{tpu_custom_call.1} parent=1 // pred_fallthru
      _
    %841 = vsyncpa [#allocation3], 1
    %842 = vsyncpa [#allocation6], 1
    %843 = vsyncpa [#allocation9], 1
    %844 = vsyncpa [#allocation4], 1

</llo_original>
